<compile_context>
chip_gen: v7x
topology: tpu7x:2x2x1
jax: 0.10.0
libtpu: 0.0.40
codegen_flags: <defaults>
</compile_context>

<pallas_src>
import functools

import jax
import jax.numpy as jnp
from jax import lax
from jax.experimental import pallas as pl
from jax.experimental.pallas import tpu as pltpu


def _mbd_kernel(x_full_ref, t_ref, s_ref, ox_ref, m_ref, *,
                n_total, row_block, j_chunk, bc, b_pad):
    t = t_ref[...]                       # (F_in, BC)     f32
    s = s_ref[...]                       # (BC,  B_pad)   f32, block-diag ones

    # Full-minibatch M = x @ T, lane-dense (N, BC).  Recomputed per i-tile so
    # the kernel is correct under megacore "parallel" grid sharding.
    m_ref[...] = jnp.dot(x_full_ref[...], t, preferred_element_type=jnp.float32)

    i0 = pl.multiple_of(pl.program_id(0) * row_block, row_block)
    m_i = m_ref[pl.ds(i0, row_block), :]                     # (tile_n, BC)

    num_chunks = n_total // j_chunk

    def body(c, ox):
        j0 = pl.multiple_of(c * j_chunk, j_chunk)
        m_j = m_ref[pl.ds(j0, j_chunk), :]                   # (jc, BC)
        # Lane-dense pairwise |diff| on the VPU (full 128-lane vregs).
        diff = jnp.abs(m_i[:, None, :] - m_j[None, :, :])    # (tile_n, jc, BC)
        # Segment-sum over kernel_dims groups on the MXU.
        norm = jnp.dot(diff.reshape(row_block * j_chunk, bc), s,
                       preferred_element_type=jnp.float32)   # (tile_n*jc, B_pad)
        # One batched exp per chunk (EUP), then reduce over the j-chunk.
        e = jnp.exp(-norm).reshape(row_block, j_chunk, b_pad)
        return ox + jnp.sum(e, axis=1)

    ox = lax.fori_loop(0, num_chunks, body,
                       jnp.zeros((row_block, b_pad), jnp.float32),
                       unroll=min(4, num_chunks))
    ox_ref[...] = ox


def minibatch_discriminator(x, T, out_features, kernel_dims, *, row_block=None):
    n, in_features = x.shape
    bc = out_features * kernel_dims
    assert T.shape == (in_features, bc)

    # Pad the oX width to a lane-dense multiple of 128 for an unmasked store.
    b_pad = ((out_features + 127) // 128) * 128

    if row_block is None:
        if n <= 128:
            row_block = n
        elif n % 128 == 0:
            row_block = 128
        else:
            row_block = n               # fall back to a single full tile
    assert n % row_block == 0

    j_chunk = 8 if n % 8 == 0 else 1    # chunk of j rows per fori_loop step

    # Static block-diagonal segment-sum matrix: S[b*C + c, b] = 1.
    idx = jnp.arange(bc)
    s = jnp.zeros((bc, b_pad), jnp.float32).at[idx, idx // kernel_dims].set(1.0)

    kernel = functools.partial(
        _mbd_kernel,
        n_total=n, row_block=row_block, j_chunk=j_chunk, bc=bc, b_pad=b_pad,
    )

    ox_padded = pl.pallas_call(
        kernel,
        out_shape=jax.ShapeDtypeStruct((n, b_pad), jnp.float32),
        grid_spec=pltpu.PrefetchScalarGridSpec(
            num_scalar_prefetch=0,
            grid=(n // row_block,),
            in_specs=[
                # Full x every step (needed for the full-minibatch M).
                pl.BlockSpec((n, in_features), lambda i: (0, 0)),
                pl.BlockSpec((in_features, bc), lambda i: (0, 0)),
                pl.BlockSpec((bc, b_pad), lambda i: (0, 0)),
            ],
            out_specs=pl.BlockSpec((row_block, b_pad), lambda i: (i, 0)),
            scratch_shapes=[pltpu.VMEM((n, bc), jnp.float32)],
        ),
        compiler_params=pltpu.CompilerParams(
            dimension_semantics=("parallel",)),
    )(x, T, s)

    # Lane-dense kernel output; concat with x at full DMA bandwidth in XLA.
    return jnp.concatenate([x, ox_padded[:, :out_features]], axis=1)


def _reference(x, T, out_features, kernel_dims):
    n = x.shape[0]
    m = (x @ T).reshape(n, out_features, kernel_dims)
    norm = jnp.abs(m[None, :, :, :] - m[:, None, :, :]).sum(-1)
    ox = jnp.exp(-norm).sum(0)
    return jnp.concatenate([x, ox], axis=1)


if __name__ == "__main__":
    # batch N = 8, in_features = 32, out_features = 16, kernel_dims = 8
    N, IN_FEATURES, OUT_FEATURES, KERNEL_DIMS = 8, 32, 16, 8

    key = jax.random.PRNGKey(0)
    kx, kt = jax.random.split(key)
    x = jax.random.normal(kx, (N, IN_FEATURES), dtype=jnp.float32)
    # init.normal_(self.T, 0, 1)
    T = jax.random.normal(kt, (IN_FEATURES, OUT_FEATURES * KERNEL_DIMS),
                          dtype=jnp.float32)

    out = minibatch_discriminator(x, T, OUT_FEATURES, KERNEL_DIMS)
    out = jax.block_until_ready(out)

    ref = _reference(x, T, OUT_FEATURES, KERNEL_DIMS)
    assert out.shape == (N, IN_FEATURES + OUT_FEATURES)
    assert jnp.allclose(out, ref, atol=2e-3, rtol=2e-3), "mismatch vs reference"

    print("KERNEL_OK")
</pallas_src>

<mosaic_0001>
module attributes {stable_mosaic.version = 11 : i64} {
  func.func @_mbd_kernel(%arg0: i32, %arg1: memref<8x32xf32, #tpu.memory_space<vmem>>, %arg2: memref<32x128xf32, #tpu.memory_space<vmem>>, %arg3: memref<128x128xf32, #tpu.memory_space<vmem>>, %arg4: memref<8x128xf32, #tpu.memory_space<vmem>>, %arg5: memref<8x128xf32, #tpu.memory_space<vmem>>) attributes {dimension_semantics = [#tpu.dimension_semantics<parallel>], iteration_bounds = array<i64: 1>, scalar_prefetch = 0 : i64, scratch_operands = 1 : i64, tpu.core_type = #tpu.core_type<tc>, window_params = [{pipeline_mode = #tpu.pipeline_mode<synchronous>, transform_indices = @transform_0, window_bounds = array<i64: 8, 32>}, {pipeline_mode = #tpu.pipeline_mode<synchronous>, transform_indices = @transform_1, window_bounds = array<i64: 32, 128>}, {pipeline_mode = #tpu.pipeline_mode<synchronous>, transform_indices = @transform_2, window_bounds = array<i64: 128, 128>}, {transform_indices = @transform_3, window_bounds = array<i64: 8, 128>}]} {
    %c0 = arith.constant 0 : index
    %c0_0 = arith.constant 0 : index
    %0 = vector.load %arg2[%c0, %c0_0] : memref<32x128xf32, #tpu.memory_space<vmem>>, vector<32x128xf32>
    %c0_1 = arith.constant 0 : index
    %c0_2 = arith.constant 0 : index
    %1 = vector.load %arg3[%c0_1, %c0_2] : memref<128x128xf32, #tpu.memory_space<vmem>>, vector<128x128xf32>
    %c0_3 = arith.constant 0 : index
    %c0_4 = arith.constant 0 : index
    %2 = vector.load %arg1[%c0_3, %c0_4] : memref<8x32xf32, #tpu.memory_space<vmem>>, vector<8x32xf32>
    %cst = arith.constant dense<0.000000e+00> : vector<8x128xf32>
    %3 = tpu.matmul %2, %0, %cst {dimension_numbers = #tpu.dot_dimension_numbers<[1], [0], [0], [1], [0, 0, 1, 1], [], []>} : vector<8x32xf32>, vector<32x128xf32>, vector<8x128xf32> -> vector<8x128xf32>
    %c0_5 = arith.constant 0 : index
    %c0_6 = arith.constant 0 : index
    %4 = vector.load %arg5[%c0_5, %c0_6] : memref<8x128xf32, #tpu.memory_space<vmem>>, vector<8x128xf32>
    tpu.vector_store %arg5[%c0_5, %c0_6], %3 {strides = array<i32>} : memref<8x128xf32, #tpu.memory_space<vmem>>, vector<8x128xf32>,
    %c8_i32 = arith.constant 8 : i32
    %5 = arith.muli %arg0, %c8_i32 : i32
    %6 = tpu.assume_multiple %5, 8 : i32
    %7 = arith.index_cast %6 : i32 to index
    %c0_7 = arith.constant 0 : index
    %8 = vector.load %arg5[%7, %c0_7] : memref<8x128xf32, #tpu.memory_space<vmem>>, vector<8x128xf32>
    %cst_8 = arith.constant 0.000000e+00 : f32
    %9 = vector.broadcast %cst_8 : f32 to vector<8x128xf32>
    %c0_i32 = arith.constant 0 : i32
    %c8_i32_9 = arith.constant 8 : i32
    %10 = arith.muli %c0_i32, %c8_i32_9 : i32
    %11 = tpu.assume_multiple %10, 8 : i32
    %12 = arith.index_cast %11 : i32 to index
    %c0_10 = arith.constant 0 : index
    %13 = vector.load %arg5[%12, %c0_10] : memref<8x128xf32, #tpu.memory_space<vmem>>, vector<8x128xf32>
    %14 = vector.shape_cast %8 : vector<8x128xf32> to vector<8x1x128xf32>
    %15 = vector.shape_cast %13 : vector<8x128xf32> to vector<1x8x128xf32>
    %16 = vector.broadcast %14 : vector<8x1x128xf32> to vector<8x8x128xf32>
    %17 = vector.broadcast %15 : vector<1x8x128xf32> to vector<8x8x128xf32>
    %18 = arith.subf %16, %17 : vector<8x8x128xf32>
    %19 = math.absf %18 : vector<8x8x128xf32>
    %20 = vector.shape_cast %19 : vector<8x8x128xf32> to vector<64x128xf32>
    %cst_11 = arith.constant dense<0.000000e+00> : vector<64x128xf32>
    %21 = tpu.matmul %20, %1, %cst_11 {dimension_numbers = #tpu.dot_dimension_numbers<[1], [0], [0], [1], [0, 0, 1, 1], [], []>} : vector<64x128xf32>, vector<128x128xf32>, vector<64x128xf32> -> vector<64x128xf32>
    %cst_12 = arith.constant 0.000000e+00 : f32
    %22 = vector.broadcast %cst_12 : f32 to vector<64x128xf32>
    %23 = arith.subf %22, %21 : vector<64x128xf32>
    %24 = math.exp %23 : vector<64x128xf32>
    %25 = vector.shape_cast %24 : vector<64x128xf32> to vector<8x8x128xf32>
    %cst_13 = arith.constant dense<0.000000e+00> : vector<8x128xf32>
    %26 = vector.multi_reduction <add>, %25, %cst_13 [1] : vector<8x8x128xf32> to vector<8x128xf32>
    %27 = arith.addf %9, %26 : vector<8x128xf32>
    %c1_i32 = arith.constant 1 : i32
    %c0_14 = arith.constant 0 : index
    %c0_15 = arith.constant 0 : index
    %28 = vector.load %arg4[%c0_14, %c0_15] : memref<8x128xf32, #tpu.memory_space<vmem>>, vector<8x128xf32>
    tpu.vector_store %arg4[%c0_14, %c0_15], %27 {strides = array<i32>} : memref<8x128xf32, #tpu.memory_space<vmem>>, vector<8x128xf32>,
    return
  }
  func.func @transform_0(%arg0: i32) -> (i32, i32) {
    %c0_i32 = arith.constant 0 : i32
    %c0_i32_0 = arith.constant 0 : i32
    %c0_i32_1 = arith.constant 0 : i32
    return %c0_i32, %c0_i32_0 : i32, i32
  }
  func.func @transform_1(%arg0: i32) -> (i32, i32) {
    %c0_i32 = arith.constant 0 : i32
    %c0_i32_0 = arith.constant 0 : i32
    %c0_i32_1 = arith.constant 0 : i32
    return %c0_i32, %c0_i32_0 : i32, i32
  }
  func.func @transform_2(%arg0: i32) -> (i32, i32) {
    %c0_i32 = arith.constant 0 : i32
    %c0_i32_0 = arith.constant 0 : i32
    %c0_i32_1 = arith.constant 0 : i32
    return %c0_i32, %c0_i32_0 : i32, i32
  }
  func.func @transform_3(%arg0: i32) -> (i32, i32) {
    %c0_i32 = arith.constant 0 : i32
    %c0_i32_0 = arith.constant 0 : i32
    return %arg0, %c0_i32 : i32, i32
  }
}

</mosaic_0001>

<llo_original>
// kernel: tpu_custom_call.1
$region0: #{tpu_custom_call.1}
  #allocation0 [shape = 'u32[]', space=smem, size = 0x4, offset = 0x4, fixed_abs, tag = 'smem constant byte address 0x4 - core index']
  #allocation1 [shape = 'u32[144,128]{1,0:T(1,128)}', space=vmem, size = 0x12000, scoped, tag = 'internal scratch']
  #allocation2 [shape = 'f32[8,128]{1,0:T(8,128)}', space=vmem, size = 0x1000, scoped, tag = 'scratch operand']
  %s0 = inlined_call_operand.hbm [shape: f32[8,32], index: 0, kind: input, shape index: {}]
  %s1 = inlined_call_operand.hbm [shape: f32[32,128], index: 1, kind: input, shape index: {}]
  %s2 = inlined_call_operand.hbm [shape: f32[128,128], index: 2, kind: input, shape index: {}]
  %s3 = inlined_call_operand.hbm [shape: f32[8,128], index: 3, kind: output, shape index: {}]
  %s4 = sld [smem:[#allocation0]]
  $region34: #{tpu_custom_call.1} parent=0
    _
  %s6 = ssub.s32 1, %s4
  %s7 = scalar_select 0, %s6, %s4
  $region1: #{tpu_custom_call.1} parent=0
    #allocation3 [shape = 'u8[4096]{0}', space=vmem, size = 0x1000, scoped, tag = 'input window, operand 0, single buffered']
    #allocation4 [shape = 's32[1]{0}', space=sflag, size = 0x4, scoped, tag = 'scoped memory for tpu_custom_call.1']
    #allocation5 [shape = 's32[1]{0}', space=sflag, size = 0x4, scoped, tag = 'scoped memory for tpu_custom_call.1']
    #allocation6 [shape = 'u8[16384]{0}', space=vmem, size = 0x4000, scoped, tag = 'input window, operand 1, single buffered']
    #allocation7 [shape = 's32[1]{0}', space=sflag, size = 0x4, scoped, tag = 'scoped memory for tpu_custom_call.1']
    #allocation8 [shape = 'u8[65536]{0}', space=vmem, size = 0x10000, scoped, tag = 'input window, operand 2, single buffered']
    #allocation9 [shape = 'u8[4096]{0}', space=vmem, size = 0x1000, scoped, tag = 'output window, operand 0, single buffered']
    %8 = vsyncpa [#allocation4], 0
    %9 = vsyncpa [#allocation7], 0
    %10 = vsyncpa [#allocation5], 0
    // Predicated region
    $region2: #{tpu_custom_call.1} parent=1 // pred_check
      _
    $region3: #{tpu_custom_call.1} parent=1 // pred_check_branch
      %12 = sbr.rel (0) target = $region5
    $region4: #{tpu_custom_call.1} parent=1 // pred_region
      %s14 = ssub.s32 128, 128
      %15 = vsyncadd [#allocation4], %s14
      %s17 = sshll.u32 [#allocation3], 4
      %s18 = int_to_ptr.vmem [resolvable:$true] %s17
      %20 = dma.hbm_to_vmem [thread:$0]  %s0, 128, %s18, [#allocation4]
    $region5: #{tpu_custom_call.1} parent=1 // pred_fallthru
      _
    // Predicated region
    $region6: #{tpu_custom_call.1} parent=1 // pred_check
      _
    $region7: #{tpu_custom_call.1} parent=1 // pred_check_branch
      %22 = sbr.rel (0) target = $region9
    $region8: #{tpu_custom_call.1} parent=1 // pred_region
      %s24 = ssub.s32 512, 512
      %25 = vsyncadd [#allocation7], %s24
      %s26 = sshll.u32 [#allocation6], 4
      %s27 = int_to_ptr.vmem [resolvable:$true] %s26
      %32 = dma.hbm_to_vmem [thread:$0]  %s1, 512, %s27, [#allocation7], 128, 128, 8
    $region9: #{tpu_custom_call.1} parent=1 // pred_fallthru
      _
    // Predicated region
    $region10: #{tpu_custom_call.1} parent=1 // pred_check
      _
    $region11: #{tpu_custom_call.1} parent=1 // pred_check_branch
      %34 = sbr.rel (0) target = $region13
    $region12: #{tpu_custom_call.1} parent=1 // pred_region
      %s36 = ssub.s32 2048, 2048
      %37 = vsyncadd [#allocation7], %s36
      %s38 = sshll.u32 [#allocation8], 4
      %s39 = int_to_ptr.vmem [resolvable:$true] %s38
      %44 = dma.hbm_to_vmem [thread:$0]  %s2, 2048, %s39, [#allocation7], 128, 128, 8
    $region13: #{tpu_custom_call.1} parent=1 // pred_fallthru
      _
    // Predicated region
    $region14: #{tpu_custom_call.1} parent=1 // pred_check
      _
    $region15: #{tpu_custom_call.1} parent=1 // pred_check_branch
      %46 = sbr.rel (0) target = $region17
    $region16: #{tpu_custom_call.1} parent=1 // pred_region
      %47 = dma.done [#allocation4], 128
    $region17: #{tpu_custom_call.1} parent=1 // pred_fallthru
      _
    // Predicated region
    $region18: #{tpu_custom_call.1} parent=1 // pred_check
      _
    $region19: #{tpu_custom_call.1} parent=1 // pred_check_branch
      %49 = sbr.rel (0) target = $region21
    $region20: #{tpu_custom_call.1} parent=1 // pred_region
      %50 = dma.done [#allocation7], 512
    $region21: #{tpu_custom_call.1} parent=1 // pred_fallthru
      _
    // Predicated region
    $region22: #{tpu_custom_call.1} parent=1 // pred_check
      _
    $region23: #{tpu_custom_call.1} parent=1 // pred_check_branch
      %52 = sbr.rel (0) target = $region25
    $region24: #{tpu_custom_call.1} parent=1 // pred_region
      %53 = dma.done [#allocation7], 2048
    $region25: #{tpu_custom_call.1} parent=1 // pred_fallthru
      _
    %v54 = vld [vmem:[#allocation6] sm:$0xff]
    %v55 = vld [vmem:[#allocation6 + $0x8] sm:$0xff]
    %v56 = vld [vmem:[#allocation6 + $0x10] sm:$0xff]
    %v57 = vld [vmem:[#allocation6 + $0x18] sm:$0xff]
    %v58 = vld [vmem:[#allocation8] sm:$0xff]
    %v59 = vld [vmem:[#allocation8 + $0x8] sm:$0xff]
    %v60 = vld [vmem:[#allocation8 + $0x10] sm:$0xff]
    %v61 = vld [vmem:[#allocation8 + $0x18] sm:$0xff]
    %v62 = vld [vmem:[#allocation8 + $0x20] sm:$0xff]
    %v63 = vld [vmem:[#allocation8 + $0x28] sm:$0xff]
    %v64 = vld [vmem:[#allocation8 + $0x30] sm:$0xff]
    %v65 = vld [vmem:[#allocation8 + $0x38] sm:$0xff]
    %v66 = vld [vmem:[#allocation8 + $0x40] sm:$0xff]
    %v67 = vld [vmem:[#allocation8 + $0x48] sm:$0xff]
    %v68 = vld [vmem:[#allocation8 + $0x50] sm:$0xff]
    %v69 = vld [vmem:[#allocation8 + $0x58] sm:$0xff]
    %v70 = vld [vmem:[#allocation8 + $0x60] sm:$0xff]
    %v71 = vld [vmem:[#allocation8 + $0x68] sm:$0xff]
    %v72 = vld [vmem:[#allocation8 + $0x70] sm:$0xff]
    %v73 = vld [vmem:[#allocation8 + $0x78] sm:$0xff]
    %v74 = vld [vmem:[#allocation3] sm:$0xff]
    %vm75 = vcmask 261120
    %v77 = vsel %vm75, %v74, 0
    %79 = vmatprep.subr.mxu0 0.0
    %80 = vmatpush1.msra.mxu0 %v54
    %81 = vmatprep.subr.mxu0 0.0
    %82 = vmatpush1.msra.mxu0 %v55
    %83 = vmatprep.subr.mxu0 0.0
    %84 = vmatpush1.msra.mxu0 %v56
    %85 = vmatprep.subr.mxu0 0.0
    %86 = vmatpush1.msra.mxu0 %v57
    %87 = vmatprep.subr.mxu0 0.0
    %88 = vmatpush1.msra.mxu0 0.0
    %89 = vmatprep.subr.mxu0 0.0
    %90 = vmatpush1.msra.mxu0 0.0
    %91 = vmatprep.subr.mxu0 0.0
    %92 = vmatpush1.msra.mxu0 0.0
    %93 = vmatprep.subr.mxu0 0.0
    %94 = vmatpush1.msra.mxu0 0.0
    %95 = vmatprep.subr.mxu0 0.0
    %96 = vmatpush1.msra.mxu0 0.0
    %97 = vmatprep.subr.mxu0 0.0
    %98 = vmatpush1.msra.mxu0 0.0
    %99 = vmatprep.subr.mxu0 0.0
    %100 = vmatpush1.msra.mxu0 0.0
    %101 = vmatprep.subr.mxu0 0.0
    %102 = vmatpush1.msra.mxu0 0.0
    %103 = vmatprep.subr.mxu0 0.0
    %104 = vmatpush1.msra.mxu0 0.0
    %105 = vmatprep.subr.mxu0 0.0
    %106 = vmatpush1.msra.mxu0 0.0
    %107 = vmatprep.subr.mxu0 0.0
    %108 = vmatpush1.msra.mxu0 0.0
    %109 = vmatprep.subr.mxu0 0.0
    %110 = vmatpush1.msra.mxu0 0.0
    %111 = vmatprep.subr.mxu0 0.0
    %112 = vmatpush1.msra.mxu0 0.0
    %113 = vmatprep.subr.mxu0 0.0
    %114 = vmatpush1.msra.mxu0 0.0
    %115 = vmatprep.subr.mxu0 0.0
    %116 = vmatpush1.msra.mxu0 0.0
    %117 = vmatprep.subr.mxu0 0.0
    %118 = vmatpush1.msra.mxu0 0.0
    %119 = vmatprep.subr.mxu0 0.0
    %120 = vmatpush1.msra.mxu0 0.0
    %121 = vmatprep.subr.mxu0 0.0
    %122 = vmatpush1.msra.mxu0 0.0
    %123 = vmatprep.subr.mxu0 0.0
    %124 = vmatpush1.msra.mxu0 0.0
    %125 = vmatprep.subr.mxu0 0.0
    %126 = vmatpush1.msra.mxu0 0.0
    %127 = vmatprep.subr.mxu0 0.0
    %128 = vmatpush1.msra.mxu0 0.0
    %129 = vmatprep.subr.mxu0 0.0
    %130 = vmatpush1.msra.mxu0 0.0
    %131 = vmatprep.subr.mxu0 0.0
    %132 = vmatpush1.msra.mxu0 0.0
    %133 = vmatprep.subr.mxu0 0.0
    %134 = vmatpush1.msra.mxu0 0.0
    %135 = vmatprep.subr.mxu0 0.0
    %136 = vmatpush1.msra.mxu0 0.0
    %137 = vmatprep.subr.mxu0 0.0
    %138 = vmatpush1.msra.mxu0 0.0
    %139 = vmatprep.subr.mxu0 0.0
    %140 = vmatpush1.msra.mxu0 0.0
    %141 = vmatprep.subr.mxu0 0.0
    %142 = vmatpush1.msra.mxu0 0.0
    %143 = vmatprep.mubr.f32.mxu0 0.0
    %144 = vmatmul.mubr.f32.gmra.mrb[0].mxu0 %v77
    %v145 = vpop.f32.mrb[0].mxu0
    %v146 = vadd.f32 0.0, %v145
    %v147 = vpop.f32.mrb[0].mxu0
    %148 = vdwg.mxu0
    %149 = vst [vmem:[#allocation2] sm:$0xff] %v146
    %s150 = smul.u32 0, 8
    %s151 = scalar_lea.vmem [#allocation2], %s150
    %v152 = vld [vmem:[%s151] sm:$0xff]
    %v153 = vld [vmem:[#allocation2] sm:$0xff]
    %v155 = vcombine.high %v152, %v152
    %v157 = vunpack.c.l.s4 1966171168
    %v158 = vunpack.c.0.s8 %v157
    %v159 = vlaneseq
    %v160 = vshrl.u32 %v159, 7
    %v161 = vsub.s32 %v158, %v160
    %v162 = vrot.slane %v152, %v161
    %v164 = vunpack.c.l.s4 1966171168
    %v165 = vunpack.c.0.s8 %v164
    %v166 = vlaneseq
    %v167 = vshrl.u32 %v166, 7
    %v168 = vsub.s32 %v165, %v167
    %v169 = vrot.slane %v155, %v168
    %v170 = vcombine.high %v162, %v162
    %v171 = vcombine.high %v169, %v169
    %v173 = vunpack.c.l.s4 1966171168
    %v174 = vunpack.c.0.s8 %v173
    %v175 = vlaneseq
    %v176 = vshrl.u32 %v175, 7
    %v177 = vsub.s32 %v174, %v176
    %v178 = vrot.slane %v162, %v177
    %v180 = vunpack.c.l.s4 1966171168
    %v181 = vunpack.c.0.s8 %v180
    %v182 = vlaneseq
    %v183 = vshrl.u32 %v182, 7
    %v184 = vsub.s32 %v181, %v183
    %v185 = vrot.slane %v169, %v184
    %v187 = vunpack.c.l.s4 1966171168
    %v188 = vunpack.c.0.s8 %v187
    %v189 = vlaneseq
    %v190 = vshrl.u32 %v189, 7
    %v191 = vsub.s32 %v188, %v190
    %v192 = vrot.slane %v170, %v191
    %v194 = vunpack.c.l.s4 1966171168
    %v195 = vunpack.c.0.s8 %v194
    %v196 = vlaneseq
    %v197 = vshrl.u32 %v196, 7
    %v198 = vsub.s32 %v195, %v197
    %v199 = vrot.slane %v171, %v198
    %v200 = vcombine.high %v178, %v178
    %v201 = vcombine.high %v185, %v185
    %v202 = vcombine.high %v192, %v192
    %v203 = vcombine.high %v199, %v199
    %v204 = vlaneseq
    %v205 = vshrl.u32 %v204, 7
    %v206 = vsub.s32 0, %v205
    %v207 = vrot.slane %v178, %v206
    %v208 = vlaneseq
    %v209 = vshrl.u32 %v208, 7
    %v210 = vsub.s32 0, %v209
    %v211 = vrot.slane %v192, %v210
    %v212 = vlaneseq
    %v213 = vshrl.u32 %v212, 7
    %v214 = vsub.s32 0, %v213
    %v215 = vrot.slane %v200, %v214
    %v216 = vlaneseq
    %v217 = vshrl.u32 %v216, 7
    %v218 = vsub.s32 0, %v217
    %v219 = vrot.slane %v202, %v218
    %v220 = vlaneseq
    %v221 = vshrl.u32 %v220, 7
    %v222 = vsub.s32 0, %v221
    %v223 = vrot.slane %v185, %v222
    %v224 = vlaneseq
    %v225 = vshrl.u32 %v224, 7
    %v226 = vsub.s32 0, %v225
    %v227 = vrot.slane %v199, %v226
    %v228 = vlaneseq
    %v229 = vshrl.u32 %v228, 7
    %v230 = vsub.s32 0, %v229
    %v231 = vrot.slane %v201, %v230
    %v232 = vlaneseq
    %v233 = vshrl.u32 %v232, 7
    %v234 = vsub.s32 0, %v233
    %v235 = vrot.slane %v203, %v234
    %v244 = vsub.f32 %v207, %v153
    %v245 = vsub.f32 %v211, %v153
    %v246 = vsub.f32 %v215, %v153
    %v247 = vsub.f32 %v219, %v153
    %v248 = vsub.f32 %v223, %v153
    %v249 = vsub.f32 %v227, %v153
    %v250 = vsub.f32 %v231, %v153
    %v251 = vsub.f32 %v235, %v153
    %v252 = vand.u32 2147483647, %v244
    %v253 = vand.u32 2147483647, %v245
    %v254 = vand.u32 2147483647, %v246
    %v255 = vand.u32 2147483647, %v247
    %v256 = vand.u32 2147483647, %v248
    %v257 = vand.u32 2147483647, %v249
    %v258 = vand.u32 2147483647, %v250
    %v259 = vand.u32 2147483647, %v251
    %260 = vmatprep.subr.mxu0 0.0
    %261 = vmatpush1.msra.mxu0 %v58
    %262 = vmatprep.subr.mxu0 0.0
    %263 = vmatpush1.msra.mxu0 %v59
    %264 = vmatprep.subr.mxu0 0.0
    %265 = vmatpush1.msra.mxu0 %v60
    %266 = vmatprep.subr.mxu0 0.0
    %267 = vmatpush1.msra.mxu0 %v61
    %268 = vmatprep.subr.mxu0 0.0
    %269 = vmatpush1.msra.mxu0 %v62
    %270 = vmatprep.subr.mxu0 0.0
    %271 = vmatpush1.msra.mxu0 %v63
    %272 = vmatprep.subr.mxu0 0.0
    %273 = vmatpush1.msra.mxu0 %v64
    %274 = vmatprep.subr.mxu0 0.0
    %275 = vmatpush1.msra.mxu0 %v65
    %276 = vmatprep.subr.mxu0 0.0
    %277 = vmatpush1.msra.mxu0 %v66
    %278 = vmatprep.subr.mxu0 0.0
    %279 = vmatpush1.msra.mxu0 %v67
    %280 = vmatprep.subr.mxu0 0.0
    %281 = vmatpush1.msra.mxu0 %v68
    %282 = vmatprep.subr.mxu0 0.0
    %283 = vmatpush1.msra.mxu0 %v69
    %284 = vmatprep.subr.mxu0 0.0
    %285 = vmatpush1.msra.mxu0 %v70
    %286 = vmatprep.subr.mxu0 0.0
    %287 = vmatpush1.msra.mxu0 %v71
    %288 = vmatprep.subr.mxu0 0.0
    %289 = vmatpush1.msra.mxu0 %v72
    %290 = vmatprep.subr.mxu0 0.0
    %291 = vmatpush1.msra.mxu0 %v73
    %292 = vmatprep.subr.mxu0 0.0
    %293 = vmatpush1.msra.mxu0 0.0
    %294 = vmatprep.subr.mxu0 0.0
    %295 = vmatpush1.msra.mxu0 0.0
    %296 = vmatprep.subr.mxu0 0.0
    %297 = vmatpush1.msra.mxu0 0.0
    %298 = vmatprep.subr.mxu0 0.0
    %299 = vmatpush1.msra.mxu0 0.0
    %300 = vmatprep.subr.mxu0 0.0
    %301 = vmatpush1.msra.mxu0 0.0
    %302 = vmatprep.subr.mxu0 0.0
    %303 = vmatpush1.msra.mxu0 0.0
    %304 = vmatprep.subr.mxu0 0.0
    %305 = vmatpush1.msra.mxu0 0.0
    %306 = vmatprep.subr.mxu0 0.0
    %307 = vmatpush1.msra.mxu0 0.0
    %308 = vmatprep.subr.mxu0 0.0
    %309 = vmatpush1.msra.mxu0 0.0
    %310 = vmatprep.subr.mxu0 0.0
    %311 = vmatpush1.msra.mxu0 0.0
    %312 = vmatprep.subr.mxu0 0.0
    %313 = vmatpush1.msra.mxu0 0.0
    %314 = vmatprep.subr.mxu0 0.0
    %315 = vmatpush1.msra.mxu0 0.0
    %316 = vmatprep.subr.mxu0 0.0
    %317 = vmatpush1.msra.mxu0 0.0
    %318 = vmatprep.subr.mxu0 0.0
    %319 = vmatpush1.msra.mxu0 0.0
    %320 = vmatprep.subr.mxu0 0.0
    %321 = vmatpush1.msra.mxu0 0.0
    %322 = vmatprep.subr.mxu0 0.0
    %323 = vmatpush1.msra.mxu0 0.0
    %324 = vmatprep.mubr.f32.mxu0 0.0
    %325 = vmatmul.mubr.f32.gmra.mrb[0].mxu0 %v252
    %v326 = vpop.f32.mrb[0].mxu0
    %v327 = vadd.f32 0.0, %v326
    %v328 = vpop.f32.mrb[0].mxu0
    %329 = vmatprep.mubr.f32.mxu0 0.0
    %330 = vmatmul.mubr.f32.gmra.mrb[0].mxu0 %v253
    %v331 = vpop.f32.mrb[0].mxu0
    %v332 = vadd.f32 0.0, %v331
    %v333 = vpop.f32.mrb[0].mxu0
    %334 = vmatprep.mubr.f32.mxu0 0.0
    %335 = vmatmul.mubr.f32.gmra.mrb[0].mxu0 %v254
    %v336 = vpop.f32.mrb[0].mxu0
    %v337 = vadd.f32 0.0, %v336
    %v338 = vpop.f32.mrb[0].mxu0
    %339 = vmatprep.mubr.f32.mxu0 0.0
    %340 = vmatmul.mubr.f32.gmra.mrb[0].mxu0 %v255
    %v341 = vpop.f32.mrb[0].mxu0
    %v342 = vadd.f32 0.0, %v341
    %v343 = vpop.f32.mrb[0].mxu0
    %344 = vmatprep.mubr.f32.mxu0 0.0
    %345 = vmatmul.mubr.f32.gmra.mrb[0].mxu0 %v256
    %v346 = vpop.f32.mrb[0].mxu0
    %v347 = vadd.f32 0.0, %v346
    %v348 = vpop.f32.mrb[0].mxu0
    %349 = vmatprep.mubr.f32.mxu0 0.0
    %350 = vmatmul.mubr.f32.gmra.mrb[0].mxu0 %v257
    %v351 = vpop.f32.mrb[0].mxu0
    %v352 = vadd.f32 0.0, %v351
    %v353 = vpop.f32.mrb[0].mxu0
    %354 = vmatprep.mubr.f32.mxu0 0.0
    %355 = vmatmul.mubr.f32.gmra.mrb[0].mxu0 %v258
    %v356 = vpop.f32.mrb[0].mxu0
    %v357 = vadd.f32 0.0, %v356
    %v358 = vpop.f32.mrb[0].mxu0
    %359 = vmatprep.mubr.f32.mxu0 0.0
    %360 = vmatmul.mubr.f32.gmra.mrb[0].mxu0 %v259
    %v361 = vpop.f32.mrb[0].mxu0
    %v362 = vadd.f32 0.0, %v361
    %v363 = vpop.f32.mrb[0].mxu0
    %364 = vdwg.mxu0
    %v365 = vsub.f32 0.0, %v327
    %v366 = vsub.f32 0.0, %v332
    %v367 = vsub.f32 0.0, %v337
    %v368 = vsub.f32 0.0, %v342
    %v369 = vsub.f32 0.0, %v347
    %v370 = vsub.f32 0.0, %v352
    %v371 = vsub.f32 0.0, %v357
    %v372 = vsub.f32 0.0, %v362
    %v373 = vmul.f32 %v365, 1.442695
    %v374 = vpow.pop %v373
    %v375 = vmul.f32 %v366, 1.442695
    %v376 = vpow.pop %v375
    %v377 = vmul.f32 %v367, 1.442695
    %v378 = vpow.pop %v377
    %v379 = vmul.f32 %v368, 1.442695
    %v380 = vpow.pop %v379
    %v381 = vmul.f32 %v369, 1.442695
    %v382 = vpow.pop %v381
    %v383 = vmul.f32 %v370, 1.442695
    %v384 = vpow.pop %v383
    %v385 = vmul.f32 %v371, 1.442695
    %v386 = vpow.pop %v385
    %v387 = vmul.f32 %v372, 1.442695
    %v388 = vpow.pop %v387
    %v389 = vrot.slane %v374, 4
    %v390 = vadd.f32 %v374, %v389
    %v391 = vrot.slane %v390, 2
    %v392 = vadd.f32 %v390, %v391
    %v393 = vrot.slane %v392, 1
    %v394 = vadd.f32 %v392, %v393
    %v395 = vrot.slane %v376, 4
    %v396 = vadd.f32 %v376, %v395
    %v397 = vrot.slane %v396, 2
    %v398 = vadd.f32 %v396, %v397
    %v399 = vrot.slane %v398, 1
    %v400 = vadd.f32 %v398, %v399
    %v401 = vrot.slane %v378, 4
    %v402 = vadd.f32 %v378, %v401
    %v403 = vrot.slane %v402, 2
    %v404 = vadd.f32 %v402, %v403
    %v405 = vrot.slane %v404, 1
    %v406 = vadd.f32 %v404, %v405
    %v407 = vrot.slane %v380, 4
    %v408 = vadd.f32 %v380, %v407
    %v409 = vrot.slane %v408, 2
    %v410 = vadd.f32 %v408, %v409
    %v411 = vrot.slane %v410, 1
    %v412 = vadd.f32 %v410, %v411
    %v413 = vrot.slane %v382, 4
    %v414 = vadd.f32 %v382, %v413
    %v415 = vrot.slane %v414, 2
    %v416 = vadd.f32 %v414, %v415
    %v417 = vrot.slane %v416, 1
    %v418 = vadd.f32 %v416, %v417
    %v419 = vrot.slane %v384, 4
    %v420 = vadd.f32 %v384, %v419
    %v421 = vrot.slane %v420, 2
    %v422 = vadd.f32 %v420, %v421
    %v423 = vrot.slane %v422, 1
    %v424 = vadd.f32 %v422, %v423
    %v425 = vrot.slane %v386, 4
    %v426 = vadd.f32 %v386, %v425
    %v427 = vrot.slane %v426, 2
    %v428 = vadd.f32 %v426, %v427
    %v429 = vrot.slane %v428, 1
    %v430 = vadd.f32 %v428, %v429
    %v431 = vrot.slane %v388, 4
    %v432 = vadd.f32 %v388, %v431
    %v433 = vrot.slane %v432, 2
    %v434 = vadd.f32 %v432, %v433
    %v435 = vrot.slane %v434, 1
    %v436 = vadd.f32 %v434, %v435
    %v437 = vadd.f32 %v394, 0.0
    %v438 = vadd.f32 %v400, 0.0
    %v439 = vadd.f32 %v406, 0.0
    %v440 = vadd.f32 %v412, 0.0
    %v441 = vadd.f32 %v418, 0.0
    %v442 = vadd.f32 %v424, 0.0
    %v443 = vadd.f32 %v430, 0.0
    %v444 = vadd.f32 %v436, 0.0
    %vm453 = vcmask 1041409
    %v454 = vsel %vm453, %v438, %v437
    %vm455 = vcmask 1042434
    %v456 = vsel %vm455, %v439, %v454
    %vm457 = vcmask 1043459
    %v458 = vsel %vm457, %v440, %v456
    %vm459 = vcmask 1044484
    %v460 = vsel %vm459, %v441, %v458
    %vm461 = vcmask 1045509
    %v462 = vsel %vm461, %v442, %v460
    %vm463 = vcmask 1046534
    %v464 = vsel %vm463, %v443, %v462
    %vm465 = vcmask 1047559
    %v466 = vsel %vm465, %v444, %v464
    %468 = vst [vmem:[#allocation9] sm:$0xff] %v466
    // Predicated region
    $region26: #{tpu_custom_call.1} parent=1 // pred_check
      _
    $region27: #{tpu_custom_call.1} parent=1 // pred_check_branch
      %470 = sbr.rel (0) target = $region29
    $region28: #{tpu_custom_call.1} parent=1 // pred_region
      %s472 = ssub.s32 128, 128
      %473 = vsyncadd [#allocation5], %s472
      %s475 = sshll.u32 [#allocation9], 4
      %s476 = int_to_ptr.vmem [resolvable:$true] %s475
      %478 = dma.vmem_to_hbm [thread:$0]  %s476, 128, %s3, [#allocation5]
    $region29: #{tpu_custom_call.1} parent=1 // pred_fallthru
      _
    // Predicated region
    $region30: #{tpu_custom_call.1} parent=1 // pred_check
      _
    $region31: #{tpu_custom_call.1} parent=1 // pred_check_branch
      %480 = sbr.rel (0) target = $region33
    $region32: #{tpu_custom_call.1} parent=1 // pred_region
      %481 = dma.done [#allocation5], 128
    $region33: #{tpu_custom_call.1} parent=1 // pred_fallthru
      _
    %482 = vsyncpa [#allocation4], 1
    %483 = vsyncpa [#allocation7], 1
    %484 = vsyncpa [#allocation5], 1

</llo_original>
